<compile_context>
chip_gen: v7x
topology: tpu7x:2x2x1
jax: 0.10.0
libtpu: 0.0.40
codegen_flags: <defaults>
</compile_context>

<pallas_src>
import functools
import math

import jax
import jax.numpy as jnp
from jax.experimental import pallas as pl
from jax.experimental.pallas import tpu as pltpu


# ----------------------------- kernels ------------------------------------- #

def _qkv_kernel(x_ref, w_ref, qkv_ref):
    # x_ref: (B*S, E) f32; w_ref: (E, 3*d_out) bf16 (pre-transposed, q-part pre-scaled)
    # qkv_ref: (B*S, 3*d_out) bf16 -- single lane-dense slab, no in-kernel splitting.
    x = x_ref[...].astype(jnp.bfloat16)
    qkv = jnp.dot(x, w_ref[...], preferred_element_type=jnp.float32)
    qkv_ref[...] = qkv.astype(qkv_ref.dtype)


def _attn_kernel(len_ref, q_ref, k_ref, v_ref, attn_ref, ctx_ref, *, causal, masked):
    # len_ref: (B,) int32 in SMEM (scalar prefetch)
    # q/k/v_ref: (1, H, S, Dh) bf16; attn_ref: (1, H, S, S) f32; ctx_ref: (1, H, S, Dh) bf16
    q = q_ref[0]          # 1/sqrt(Dh) score scale already folded into W_q
    k = k_ref[0]
    v = v_ref[0]
    _, s_len, _ = q.shape

    # scores: contract last dims, batched over heads (bf16 MXU operands, f32 acc)
    s = jnp.einsum('hqd,hkd->hqk', q, k, preferred_element_type=jnp.float32)

    # in-kernel additive mask built from SMEM length (shared across heads).
    # -1e30 underflows to exactly 0 after exp, matching the -inf reference masking
    # for any non-fully-masked row (and avoids NaN rows when length == 0).
    if masked or causal:
        kpos = jax.lax.broadcasted_iota(jnp.int32, (s_len, s_len), 1)
        bias = jnp.zeros((s_len, s_len), jnp.float32)
        if masked:
            length = len_ref[pl.program_id(0)]
            bias = jnp.where(kpos >= length, jnp.float32(-1e30), bias)
        if causal:
            qpos = jax.lax.broadcasted_iota(jnp.int32, (s_len, s_len), 0)
            bias = jnp.where(kpos > qpos, jnp.float32(-1e30), bias)
        s = s + bias[None, :, :]

    # softmax along last dim (exact division -> returned attention matches torch.softmax)
    m = jnp.max(s, axis=-1, keepdims=True)
    e = jnp.exp(s - m)
    p = e / jnp.sum(e, axis=-1, keepdims=True)

    attn_ref[0] = p
    ctx = jnp.einsum('hqk,hkd->hqd', p.astype(v.dtype), v,
                     preferred_element_type=jnp.float32)
    ctx_ref[0] = ctx.astype(ctx_ref.dtype)


def _out_kernel(len_ref, ctx_ref, x_ref, wo_ref, bo_ref, out_ref, *, masked):
    # ctx_ref: (1, S, d_out) bf16; x_ref: (1, S, E) f32; wo_ref: (d_out, E) bf16
    # bo_ref: (1, E) f32; len_ref: (B,) int32 in SMEM
    ctx = ctx_ref[0]
    s_len = ctx.shape[0]
    out = jnp.dot(ctx, wo_ref[...], preferred_element_type=jnp.float32) + bo_ref[...]

    if masked:
        length = len_ref[pl.program_id(0)]
        qpos = jax.lax.broadcasted_iota(jnp.int32, (s_len, 1), 0)
        out = jnp.where(qpos < length, out, jnp.float32(0.0))

    out_ref[0] = out + x_ref[0]          # residual skip (dropout p=0 -> identity)


# ----------------------------- wrapper -------------------------------------- #

def multi_head_attention(x, params, num_heads, input_lengths=None, causal=False):
    """Pallas implementation of MultiHeadAttention.forward.

    Returns (output_skip [B,S,E] f32, attention_scores [B,H,S,S] f32).
    """
    wq, wk, wv, wo, bo = params
    batch, seq_len, embed = x.shape
    d_out = wq.shape[0]
    head_dim = d_out // num_heads

    # One-time layout plumbing outside the kernels:
    #  - weights pre-transposed to [in, out], cast to bf16 once (MXU-native)
    #  - q/k/v weights concatenated for a single fused matmul
    #  - 1/sqrt(head_dim) score scale folded into the query weight (free)
    scale = 1.0 / math.sqrt(head_dim)
    w_qkv = jnp.concatenate([wq.T * scale, wk.T, wv.T], axis=1).astype(jnp.bfloat16)
    wo_t = wo.T.astype(jnp.bfloat16)                      # (d_out, E)
    bo2d = bo.reshape(1, embed).astype(jnp.float32)

    masked = input_lengths is not None
    if masked:
        lengths = input_lengths.astype(jnp.int32)
    else:
        lengths = jnp.full((batch,), seq_len, dtype=jnp.int32)

    cparams = pltpu.CompilerParams(
        dimension_semantics=("parallel",),
        vmem_limit_bytes=32 * 1024 * 1024,   # safe on v7x's 64 MiB VMEM, plenty here
    )

    # ---- fused QKV projection: (B*S, E) @ (E, 3*d_out) in ONE grid step ----
    # (For large B*S this M axis would be tiled into 256-row blocks.)
    m_rows = batch * seq_len
    x2d = x.reshape(m_rows, embed)
    qkv = pl.pallas_call(
        _qkv_kernel,
        out_shape=jax.ShapeDtypeStruct((m_rows, 3 * d_out), jnp.bfloat16),
        grid_spec=pltpu.PrefetchScalarGridSpec(
            num_scalar_prefetch=0,
            grid=(1,),
            in_specs=[
                pl.BlockSpec((m_rows, embed), lambda i: (0, 0)),
                pl.BlockSpec((embed, 3 * d_out), lambda i: (0, 0)),
            ],
            out_specs=pl.BlockSpec((m_rows, 3 * d_out), lambda i: (0, 0)),
        ),
        compiler_params=cparams,
    )(x2d, w_qkv)

    # Split q/k/v and reproduce the reference's raw `.view(B, H, S, Dh)` (no transpose)
    # -- pure slice/reshape glue on the contiguous bf16 buffer, outside the kernels.
    qkv3 = qkv.reshape(batch, seq_len, 3 * d_out)
    qh = qkv3[:, :, :d_out].reshape(batch, num_heads, seq_len, head_dim)
    kh = qkv3[:, :, d_out:2 * d_out].reshape(batch, num_heads, seq_len, head_dim)
    vh = qkv3[:, :, 2 * d_out:].reshape(batch, num_heads, seq_len, head_dim)

    # ---- attention: all heads per grid step, masks built in-kernel ----
    attn, ctx = pl.pallas_call(
        functools.partial(_attn_kernel, causal=causal, masked=masked),
        out_shape=[
            jax.ShapeDtypeStruct((batch, num_heads, seq_len, seq_len), jnp.float32),
            jax.ShapeDtypeStruct((batch, num_heads, seq_len, head_dim), jnp.bfloat16),
        ],
        grid_spec=pltpu.PrefetchScalarGridSpec(
            num_scalar_prefetch=1,
            grid=(batch,),
            in_specs=[
                pl.BlockSpec((1, num_heads, seq_len, head_dim),
                             lambda b, lens: (b, 0, 0, 0)),
            ] * 3,
            out_specs=[
                pl.BlockSpec((1, num_heads, seq_len, seq_len),
                             lambda b, lens: (b, 0, 0, 0)),
                pl.BlockSpec((1, num_heads, seq_len, head_dim),
                             lambda b, lens: (b, 0, 0, 0)),
            ],
        ),
        compiler_params=cparams,
    )(lengths, qh, kh, vh)

    # Reproduce the reference's raw `.contiguous().view(B, S, -1)` (free reshape).
    ctx_flat = ctx.reshape(batch, seq_len, d_out)

    # ---- output projection + query mask + residual ----
    out_skip = pl.pallas_call(
        functools.partial(_out_kernel, masked=masked),
        out_shape=jax.ShapeDtypeStruct((batch, seq_len, embed), jnp.float32),
        grid_spec=pltpu.PrefetchScalarGridSpec(
            num_scalar_prefetch=1,
            grid=(batch,),
            in_specs=[
                pl.BlockSpec((1, seq_len, d_out), lambda b, lens: (b, 0, 0)),
                pl.BlockSpec((1, seq_len, embed), lambda b, lens: (b, 0, 0)),
                pl.BlockSpec((d_out, embed), lambda b, lens: (0, 0)),
                pl.BlockSpec((1, embed), lambda b, lens: (0, 0)),
            ],
            out_specs=pl.BlockSpec((1, seq_len, embed), lambda b, lens: (b, 0, 0)),
        ),
        compiler_params=cparams,
    )(lengths, ctx_flat, x, wo_t, bo2d)

    return out_skip, attn


# ----------------------------- pure-JAX reference ---------------------------- #

def _reference(x, params, num_heads, input_lengths=None, causal=False):
    wq, wk, wv, wo, bo = params
    batch, seq_len, embed = x.shape
    d_out = wq.shape[0]
    head_dim = d_out // num_heads
    q = (x @ wq.T).reshape(batch, num_heads, seq_len, head_dim)
    k = (x @ wk.T).reshape(batch, num_heads, seq_len, head_dim)
    v = (x @ wv.T).reshape(batch, num_heads, seq_len, head_dim)
    s = jnp.einsum('bhqd,bhkd->bhqk', q, k) / math.sqrt(head_dim)
    if input_lengths is not None:
        pad = (jnp.arange(seq_len)[None, :] >= input_lengths[:, None])[:, None, None, :]
        s = jnp.where(pad, -jnp.inf, s)
    if causal:
        cm = jnp.triu(jnp.ones((seq_len, seq_len), dtype=bool), k=1)[None, None]
        s = jnp.where(cm, -jnp.inf, s)
    p = jax.nn.softmax(s, axis=-1)
    ctx = jnp.einsum('bhqk,bhkd->bhqd', p, v).reshape(batch, seq_len, d_out)
    out = ctx @ wo.T + bo
    if input_lengths is not None:
        qm = (jnp.arange(seq_len)[None, :] < input_lengths[:, None])[..., None]
        out = out * qm
    return out + x, p


# ----------------------------- main ------------------------------------------ #

if __name__ == "__main__":
    batch, seq_len, embed = 2, 8, 32
    d_out_n_heads, num_heads = 32, 4          # head_dim = 8

    key = jax.random.PRNGKey(0)
    kx, kq, kk, kv, ko, kb = jax.random.split(key, 6)
    x = jax.random.normal(kx, (batch, seq_len, embed), jnp.float32)
    wscale = 1.0 / math.sqrt(embed)
    wq = jax.random.normal(kq, (d_out_n_heads, embed), jnp.float32) * wscale
    wk = jax.random.normal(kk, (d_out_n_heads, embed), jnp.float32) * wscale
    wv = jax.random.normal(kv, (d_out_n_heads, embed), jnp.float32) * wscale
    wo = jax.random.normal(ko, (embed, d_out_n_heads), jnp.float32) * wscale
    bo = jax.random.normal(kb, (embed,), jnp.float32) * 0.01
    params = (wq, wk, wv, wo, bo)

    # Default path (input_lengths=None, causal=False)
    out, attn = multi_head_attention(x, params, num_heads)
    jax.block_until_ready((out, attn))

    # Path exercising causal + padding masks
    lengths = jnp.array([5, 8], dtype=jnp.int32)
    out2, attn2 = multi_head_attention(x, params, num_heads,
                                       input_lengths=lengths, causal=True)
    jax.block_until_ready((out2, attn2))

    # Cross-check against pure-JAX reference (loose tolerance: bf16 MXU operands
    # and bf16 inter-stage intermediates, f32 accumulation everywhere).
    ref_out, ref_attn = _reference(x, params, num_heads)
    ref_out2, ref_attn2 = _reference(x, params, num_heads,
                                     input_lengths=lengths, causal=True)
    assert jnp.allclose(out, ref_out, atol=3e-2, rtol=3e-2)
    assert jnp.allclose(attn, ref_attn, atol=3e-2, rtol=3e-2)
    assert jnp.allclose(out2, ref_out2, atol=3e-2, rtol=3e-2)
    assert jnp.allclose(attn2, ref_attn2, atol=3e-2, rtol=3e-2)

    print("KERNEL_OK")
</pallas_src>

<mosaic_0001>
module attributes {stable_mosaic.version = 11 : i64} {
  func.func @_qkv_kernel(%arg0: i32, %arg1: memref<16x32xf32, #tpu.memory_space<vmem>>, %arg2: memref<32x96xbf16, #tpu.memory_space<vmem>>, %arg3: memref<16x96xbf16, #tpu.memory_space<vmem>>) attributes {dimension_semantics = [#tpu.dimension_semantics<parallel>], iteration_bounds = array<i64: 1>, scalar_prefetch = 0 : i64, scratch_operands = 0 : i64, tpu.core_type = #tpu.core_type<tc>, window_params = [{pipeline_mode = #tpu.pipeline_mode<synchronous>, transform_indices = @transform_0, window_bounds = array<i64: 16, 32>}, {pipeline_mode = #tpu.pipeline_mode<synchronous>, transform_indices = @transform_1, window_bounds = array<i64: 32, 96>}, {pipeline_mode = #tpu.pipeline_mode<synchronous>, transform_indices = @transform_2, window_bounds = array<i64: 16, 96>}]} {
    %c0 = arith.constant 0 : index
    %c0_0 = arith.constant 0 : index
    %0 = vector.load %arg1[%c0, %c0_0] : memref<16x32xf32, #tpu.memory_space<vmem>>, vector<16x32xf32>
    %1 = arith.truncf %0 : vector<16x32xf32> to vector<16x32xbf16>
    %c0_1 = arith.constant 0 : index
    %c0_2 = arith.constant 0 : index
    %2 = vector.load %arg2[%c0_1, %c0_2] : memref<32x96xbf16, #tpu.memory_space<vmem>>, vector<32x96xbf16>
    %cst = arith.constant dense<0.000000e+00> : vector<16x96xf32>
    %3 = tpu.matmul %1, %2, %cst {dimension_numbers = #tpu.dot_dimension_numbers<[1], [0], [0], [1], [0, 0, 1, 1], [], []>} : vector<16x32xbf16>, vector<32x96xbf16>, vector<16x96xf32> -> vector<16x96xf32>
    %4 = arith.truncf %3 : vector<16x96xf32> to vector<16x96xbf16>
    %c0_3 = arith.constant 0 : index
    %c0_4 = arith.constant 0 : index
    %5 = vector.load %arg3[%c0_3, %c0_4] : memref<16x96xbf16, #tpu.memory_space<vmem>>, vector<16x96xbf16>
    tpu.vector_store %arg3[%c0_3, %c0_4], %4 {strides = array<i32>} : memref<16x96xbf16, #tpu.memory_space<vmem>>, vector<16x96xbf16>,
    return
  }
  func.func @transform_0(%arg0: i32) -> (i32, i32) {
    %c0_i32 = arith.constant 0 : i32
    %c0_i32_0 = arith.constant 0 : i32
    %c0_i32_1 = arith.constant 0 : i32
    return %c0_i32, %c0_i32_0 : i32, i32
  }
  func.func @transform_1(%arg0: i32) -> (i32, i32) {
    %c0_i32 = arith.constant 0 : i32
    %c0_i32_0 = arith.constant 0 : i32
    %c0_i32_1 = arith.constant 0 : i32
    return %c0_i32, %c0_i32_0 : i32, i32
  }
  func.func @transform_2(%arg0: i32) -> (i32, i32) {
    %c0_i32 = arith.constant 0 : i32
    %c0_i32_0 = arith.constant 0 : i32
    %c0_i32_1 = arith.constant 0 : i32
    return %c0_i32, %c0_i32_0 : i32, i32
  }
}

</mosaic_0001>

<llo_original>
// kernel: tpu_custom_call.1
$region0: #{tpu_custom_call.1}
  #allocation0 [shape = 'u32[]', space=smem, size = 0x4, offset = 0x4, fixed_abs, tag = 'smem constant byte address 0x4 - core index']
  #allocation1 [shape = 'u32[144,128]{1,0:T(1,128)}', space=vmem, size = 0x12000, scoped, tag = 'internal scratch']
  %s0 = inlined_call_operand.hbm [shape: f32[16,32], index: 0, kind: input, shape index: {}]
  %s1 = inlined_call_operand.hbm [shape: bf16[32,96], index: 1, kind: input, shape index: {}]
  %s2 = inlined_call_operand.hbm [shape: bf16[16,96], index: 2, kind: output, shape index: {}]
  %s3 = sld [smem:[#allocation0]]
  $region26: #{tpu_custom_call.1} parent=0
    _
  %s5 = ssub.s32 1, %s3
  %s6 = scalar_select 0, %s5, %s3
  $region1: #{tpu_custom_call.1} parent=0
    #allocation2 [shape = 'u8[8192]{0}', space=vmem, size = 0x2000, scoped, tag = 'input window, operand 0, single buffered']
    #allocation3 [shape = 's32[1]{0}', space=sflag, size = 0x4, scoped, tag = 'scoped memory for tpu_custom_call.1']
    #allocation4 [shape = 's32[1]{0}', space=sflag, size = 0x4, scoped, tag = 'scoped memory for tpu_custom_call.1']
    #allocation5 [shape = 'u8[8192]{0}', space=vmem, size = 0x2000, scoped, tag = 'input window, operand 1, single buffered']
    #allocation6 [shape = 's32[1]{0}', space=sflag, size = 0x4, scoped, tag = 'scoped memory for tpu_custom_call.1']
    #allocation7 [shape = 'u8[4096]{0}', space=vmem, size = 0x1000, scoped, tag = 'output window, operand 0, single buffered']
    %7 = vsyncpa [#allocation3], 0
    %8 = vsyncpa [#allocation6], 0
    %9 = vsyncpa [#allocation4], 0
    // Predicated region
    $region2: #{tpu_custom_call.1} parent=1 // pred_check
      _
    $region3: #{tpu_custom_call.1} parent=1 // pred_check_branch
      %11 = sbr.rel (0) target = $region5
    $region4: #{tpu_custom_call.1} parent=1 // pred_region
      %s13 = ssub.s32 256, 256
      %14 = vsyncadd [#allocation3], %s13
      %s15 = sshll.u32 [#allocation2], 4
      %s16 = int_to_ptr.vmem [resolvable:$true] %s15
      %21 = dma.hbm_to_vmem [thread:$0]  %s0, 256, %s16, [#allocation3], 128, 128, 8
    $region5: #{tpu_custom_call.1} parent=1 // pred_fallthru
      _
    // Predicated region
    $region6: #{tpu_custom_call.1} parent=1 // pred_check
      _
    $region7: #{tpu_custom_call.1} parent=1 // pred_check_branch
      %23 = sbr.rel (0) target = $region9
    $region8: #{tpu_custom_call.1} parent=1 // pred_region
      %s25 = ssub.s32 256, 256
      %26 = vsyncadd [#allocation6], %s25
      %s27 = sshll.u32 [#allocation5], 4
      %s28 = int_to_ptr.vmem [resolvable:$true] %s27
      %33 = dma.hbm_to_vmem [thread:$0]  %s1, 256, %s28, [#allocation6], 64, 64, 4
    $region9: #{tpu_custom_call.1} parent=1 // pred_fallthru
      _
    // Predicated region
    $region10: #{tpu_custom_call.1} parent=1 // pred_check
      _
    $region11: #{tpu_custom_call.1} parent=1 // pred_check_branch
      %35 = sbr.rel (0) target = $region13
    $region12: #{tpu_custom_call.1} parent=1 // pred_region
      %36 = dma.done [#allocation3], 256
    $region13: #{tpu_custom_call.1} parent=1 // pred_fallthru
      _
    // Predicated region
    $region14: #{tpu_custom_call.1} parent=1 // pred_check
      _
    $region15: #{tpu_custom_call.1} parent=1 // pred_check_branch
      %38 = sbr.rel (0) target = $region17
    $region16: #{tpu_custom_call.1} parent=1 // pred_region
      %39 = dma.done [#allocation6], 256
    $region17: #{tpu_custom_call.1} parent=1 // pred_fallthru
      _
    %v41 = vld [vmem:[#allocation2] sm:$0xff]
    %v42 = vld [vmem:[#allocation2 + $0x8] sm:$0xff]
    %v43 = vpack.c.bf16 %v42, %v41
    %v44 = vld [vmem:[#allocation5] sm:$0xf]
    %v45 = vld [vmem:[#allocation5 + $0x4] sm:$0xf]
    %v46 = vld [vmem:[#allocation5 + $0x8] sm:$0xf]
    %v47 = vld [vmem:[#allocation5 + $0xc] sm:$0xf]
    %v52 = vunpack.c.l.b16 %v44
    %v53 = vunpack.c.l.b16 %v45
    %v54 = vunpack.c.l.b16 %v46
    %v55 = vunpack.c.l.b16 %v47
    %v56 = vpack.c.b16 %v53, %v52
    %v57 = vpack.c.b16 %v55, %v54
    %vm60 = vcmask 261120
    %v62 = vsel %vm60, %v43, 0
    %64 = vmatprep.subr.bf16.mxu0 0
    %65 = vmatpush1.bf16.msra.mxu0 %v56
    %66 = vmatprep.subr.bf16.mxu0 0
    %67 = vmatpush1.bf16.msra.mxu0 %v57
    %68 = vmatprep.subr.bf16.mxu0 0
    %69 = vmatpush1.bf16.msra.mxu0 0
    %70 = vmatprep.subr.bf16.mxu0 0
    %71 = vmatpush1.bf16.msra.mxu0 0
    %72 = vmatprep.subr.bf16.mxu0 0
    %73 = vmatpush1.bf16.msra.mxu0 0
    %74 = vmatprep.subr.bf16.mxu0 0
    %75 = vmatpush1.bf16.msra.mxu0 0
    %76 = vmatprep.subr.bf16.mxu0 0
    %77 = vmatpush1.bf16.msra.mxu0 0
    %78 = vmatprep.subr.bf16.mxu0 0
    %79 = vmatpush1.bf16.msra.mxu0 0
    %80 = vmatprep.subr.bf16.mxu0 0
    %81 = vmatpush1.bf16.msra.mxu0 0
    %82 = vmatprep.subr.bf16.mxu0 0
    %83 = vmatpush1.bf16.msra.mxu0 0
    %84 = vmatprep.subr.bf16.mxu0 0
    %85 = vmatpush1.bf16.msra.mxu0 0
    %86 = vmatprep.subr.bf16.mxu0 0
    %87 = vmatpush1.bf16.msra.mxu0 0
    %88 = vmatprep.subr.bf16.mxu0 0
    %89 = vmatpush1.bf16.msra.mxu0 0
    %90 = vmatprep.subr.bf16.mxu0 0
    %91 = vmatpush1.bf16.msra.mxu0 0
    %92 = vmatprep.subr.bf16.mxu0 0
    %93 = vmatpush1.bf16.msra.mxu0 0
    %94 = vmatprep.subr.bf16.mxu0 0
    %95 = vmatpush1.bf16.msra.mxu0 0
    %96 = vmatprep.mubr.bf16.mxu0 0
    %97 = vmatmul.mubr.bf16.gmra.mrb[0].mxu0 %v62
    %v98 = vpop.f32.mrb[0].mxu0
    %v99 = vadd.f32 0.0, %v98
    %v100 = vpop.f32.mrb[0].mxu0
    %v101 = vpop.f32.mrb[0].mxu0
    %v102 = vadd.f32 0.0, %v101
    %v103 = vpop.f32.mrb[0].mxu0
    %104 = vdwg.mxu0
    %v105 = vpack.c.bf16 %v102, %v99
    %v107 = vunpack.c.l.b16 %v105
    %v108 = vunpack.c.h.b16 %v105
    %v109 = vpack.c.b16 %v107, %v107
    %v110 = vpack.c.b16 %v108, %v108
    %vm113 = vcmask 781312
    %114 = vst.msk [vmem:[#allocation7] sm:$0xf] %vm113, %v109
    %115 = vst.msk [vmem:[#allocation7 + $0x4] sm:$0xf] %vm113, %v110
    // Predicated region
    $region18: #{tpu_custom_call.1} parent=1 // pred_check
      _
    $region19: #{tpu_custom_call.1} parent=1 // pred_check_branch
      %117 = sbr.rel (0) target = $region21
    $region20: #{tpu_custom_call.1} parent=1 // pred_region
      %s119 = ssub.s32 128, 128
      %120 = vsyncadd [#allocation4], %s119
      %s121 = sshll.u32 [#allocation7], 4
      %s122 = int_to_ptr.vmem [resolvable:$true] %s121
      %127 = dma.vmem_to_hbm [thread:$0]  %s122, 128, %s2, [#allocation4], 64, 64, 4
    $region21: #{tpu_custom_call.1} parent=1 // pred_fallthru
      _
    // Predicated region
    $region22: #{tpu_custom_call.1} parent=1 // pred_check
      _
    $region23: #{tpu_custom_call.1} parent=1 // pred_check_branch
      %129 = sbr.rel (0) target = $region25
    $region24: #{tpu_custom_call.1} parent=1 // pred_region
      %130 = dma.done [#allocation4], 128
    $region25: #{tpu_custom_call.1} parent=1 // pred_fallthru
      _
    %131 = vsyncpa [#allocation3], 1
    %132 = vsyncpa [#allocation6], 1
    %133 = vsyncpa [#allocation4], 1

</llo_original>
